<compile_context>
chip_gen: v6e
topology: v6e:2x2x1
jax: 0.10.0
libtpu: 0.0.40
codegen_flags: <defaults>
</compile_context>

<pallas_src>
import functools
import math

import jax
import jax.numpy as jnp
from jax.experimental import pallas as pl
from jax.experimental.pallas import tpu as pltpu


def _round_up(x, m):
    return ((x + m - 1) // m) * m


def _bce_stable_kernel(out_ref, lab_ref, part_ref, *, eps, rows, block_rows,
                       chunk_rows, blocks_per_split, needs_mask,
                       approx_logsig):
    """Grid: (split p ["parallel"], row-block i [reduction, "arbitrary"])."""
    p = pl.program_id(0)
    i = pl.program_id(1)

    @pl.when(i == 0)
    def _():
        part_ref[...] = jnp.zeros_like(part_ref)

    if needs_mask:
        # Logical (pre-clamp) first row of this tile — only used for masking.
        base_row = (p * blocks_per_split + i) * block_rows

    # Static, fully-unrolled chunk loop: keeps VMEM temporaries bounded to
    # ~chunk_rows x 128 f32 while the DMA block (block_rows) stays large.
    for c in range(block_rows // chunk_rows):
        start = c * chunk_rows  # static, vreg-aligned offset
        x = out_ref[start:start + chunk_rows, :].astype(jnp.float32)
        y = lab_ref[start:start + chunk_rows, :].astype(jnp.float32)

        if approx_logsig:
            # Opt-in 2-transcendental path (EUP relief on v6e/v7x when the
            # kernel is no longer HBM-bound).  Not bit-identical to the
            # reference eps semantics (clamp instead of add).
            logsig = jnp.minimum(x, 0.0) - jnp.log(1.0 + jnp.exp(-jnp.abs(x)))
            log_out = jnp.maximum(logsig, jnp.float32(math.log(eps)))
        else:
            # Exactly the reference math: log(sigmoid(x) + eps).
            log_out = jnp.log(jax.nn.sigmoid(x) + jnp.float32(eps))

        prod = y * log_out

        if needs_mask:
            ridx = base_row + start + jax.lax.broadcasted_iota(
                jnp.int32, (chunk_rows, 1), 0)
            prod = jnp.where(ridx < rows, prod, 0.0)

        # Fold (chunk_rows, 128) -> (8, 128): vreg-aligned, pure VPU adds.
        part_ref[...] += prod.reshape(chunk_rows // 8, 8, 128).sum(axis=0)


def bce_stable(outputs, labels, *, eps=1e-8, block_rows=None, nsplit=1,
               approx_logsig=False):
    """Pallas implementation of BCE_Stable.forward.

    Accepts matching-shaped inputs of any rank >= 1 (labels may use a
    different floating dtype, e.g. bf16).  Returns a float32 scalar equal to
    -(1/D) * sum(labels * log(sigmoid(outputs) + eps)), D = prod(shape[1:]).
    """
    assert outputs.shape == labels.shape and outputs.ndim >= 1
    shape = outputs.shape
    total = int(math.prod(shape))
    assert total > 0, "empty input"
    d_div = 1 if outputs.ndim == 1 else total // shape[0]

    # ---- Lane-dense (rows, 128) view (layout is free to change: the result
    # ---- is a flat sum divided by D) ---------------------------------------
    if total % 128 == 0 and total >= 1024:
        rows = total // 128
        xf = outputs.reshape(rows, 128)          # free row-major reshape
        yf = labels.reshape(rows, 128)
    else:
        # Rare corner (tiny input or total % 128 != 0): zero-pad the flat view
        # (zero labels contribute exactly 0).  Only remaining wrapper copy.
        total_pad = max(1024, _round_up(total, 128))
        pad = total_pad - total
        xf = jnp.pad(outputs.reshape(-1), (0, pad)).reshape(-1, 128)
        yf = jnp.pad(labels.reshape(-1), (0, pad)).reshape(-1, 128)
        rows = total_pad // 128

    # ---- Tiling -------------------------------------------------------------
    cap = (rows // 8) * 8                        # >= 8; block never exceeds rows
    if block_rows is None:
        if cap <= 1024:
            block_rows = cap                     # single chunk, whole range
        else:
            # Up to 8192 x 128 x 4 B = 4 MiB (f32) per input per DMA block.
            block_rows = min(8192, (cap // 1024) * 1024)
    assert block_rows % 8 == 0 and 8 <= block_rows <= cap
    chunk_rows = min(block_rows, 1024)
    assert block_rows % chunk_rows == 0

    blocks_total = pl.cdiv(rows, block_rows)
    nsplit = max(1, min(int(nsplit), blocks_total))
    blocks_per_split = pl.cdiv(blocks_total, nsplit)
    # Mask only if the grid over-covers the row range (ragged last tile or
    # clamped duplicate tiles from the split rounding).
    needs_mask = nsplit * blocks_per_split * block_rows > rows

    def in_map(p, i, _bps=blocks_per_split, _nb=blocks_total):
        # Clamp fully-out-of-range logical tiles onto the last valid block;
        # their contribution is masked to zero inside the kernel.
        return (jnp.minimum(p * _bps + i, _nb - 1), 0)

    kernel = functools.partial(
        _bce_stable_kernel, eps=eps, rows=rows, block_rows=block_rows,
        chunk_rows=chunk_rows, blocks_per_split=blocks_per_split,
        needs_mask=needs_mask, approx_logsig=approx_logsig)

    # Double-buffered input blocks + headroom for in-kernel temporaries.
    in_buf_bytes = 2 * block_rows * 128 * (xf.dtype.itemsize
                                           + yf.dtype.itemsize)
    vmem_limit = int(min(48 * 1024 * 1024,
                         max(32 * 1024 * 1024, in_buf_bytes + 16 * 1024 * 1024)))

    cost = pl.CostEstimate(
        flops=4 * rows * 128,
        transcendentals=(2 if approx_logsig else 3) * rows * 128,
        bytes_accessed=rows * 128 * (xf.dtype.itemsize + yf.dtype.itemsize)
        + nsplit * 8 * 128 * 4,
    )

    partials = pl.pallas_call(
        kernel,
        out_shape=jax.ShapeDtypeStruct((nsplit * 8, 128), jnp.float32),
        grid_spec=pltpu.PrefetchScalarGridSpec(
            num_scalar_prefetch=0,
            grid=(nsplit, blocks_per_split),
            in_specs=[
                pl.BlockSpec((block_rows, 128), in_map),
                pl.BlockSpec((block_rows, 128), in_map),
            ],
            out_specs=pl.BlockSpec((8, 128), lambda p, i: (p, 0)),
        ),
        compiler_params=pltpu.CompilerParams(
            dimension_semantics=("parallel", "arbitrary"),
            vmem_limit_bytes=vmem_limit,
        ),
        cost_estimate=cost,
    )(xf, yf)

    # Tiny lane-dense partials: trivial final reduce + negate + /D in XLA.
    return -jnp.sum(partials) / jnp.float32(d_div)


def bce_stable_ref(outputs, labels, eps=1e-8):
    """Pure-JAX reference matching the PyTorch module exactly."""
    log_out = jnp.log(jax.nn.sigmoid(outputs) + eps)
    res = jnp.sum(labels * log_out, axis=0)
    return -jnp.mean(res)


if __name__ == "__main__":
    key = jax.random.PRNGKey(0)
    k = jax.random.split(key, 8)

    def ref32(o, l, eps=1e-8):
        # The kernel upcasts to f32 internally; compare against the f32 ref.
        return bce_stable_ref(o.astype(jnp.float32), l.astype(jnp.float32), eps)

    # 1) GAN-like 4-D activations (N, C, H, W): lane-dense path, single block.
    o1 = jax.random.normal(k[0], (2, 4, 16, 16), dtype=jnp.float32)
    l1 = jax.random.bernoulli(k[1], 0.5, (2, 4, 16, 16)).astype(jnp.float32)
    got1 = jax.block_until_ready(bce_stable(o1, l1))
    want1 = ref32(o1, l1)
    assert jnp.allclose(got1, want1, rtol=1e-5, atol=1e-5), (got1, want1)

    # 2) Ragged rows + 2-way split + native bf16 labels: exercises in-kernel
    #    masking, index clamping, and mixed-dtype in-kernel upcast.
    o2 = jax.random.normal(k[2], (20, 128), dtype=jnp.float32)
    l2 = jax.random.bernoulli(k[3], 0.5, (20, 128)).astype(jnp.bfloat16)
    got2 = jax.block_until_ready(bce_stable(o2, l2, block_rows=8, nsplit=2))
    want2 = ref32(o2, l2)
    assert jnp.allclose(got2, want2, rtol=1e-5, atol=1e-5), (got2, want2)

    # 3) total % 128 != 0 corner (padded-flat fallback) with bf16 logits.
    o3 = jax.random.normal(k[4], (9, 120), dtype=jnp.bfloat16)
    l3 = jax.random.bernoulli(k[5], 0.5, (9, 120)).astype(jnp.float32)
    got3 = jax.block_until_ready(bce_stable(o3, l3))
    want3 = ref32(o3, l3)
    assert jnp.allclose(got3, want3, rtol=1e-5, atol=1e-5), (got3, want3)

    # 4) D=1 discriminator output (the common GAN loss shape).
    o4 = jax.random.normal(k[6], (32, 1), dtype=jnp.float32)
    l4 = jnp.ones((32, 1), dtype=jnp.float32)
    got4 = jax.block_until_ready(bce_stable(o4, l4))
    want4 = ref32(o4, l4)
    assert jnp.allclose(got4, want4, rtol=1e-5, atol=1e-5), (got4, want4)

    # 5) Opt-in 2-transcendental path (approximate eps handling).
    got5 = jax.block_until_ready(bce_stable(o1, l1, approx_logsig=True))
    assert jnp.allclose(got5, want1, rtol=1e-4, atol=1e-4), (got5, want1)

    print("KERNEL_OK")
</pallas_src>

<mosaic_0001>
module attributes {stable_mosaic.version = 11 : i64} {
  func.func @_bce_stable_kernel(%arg0: i32, %arg1: i32, %arg2: memref<16x128xf32, #tpu.memory_space<vmem>>, %arg3: memref<16x128xf32, #tpu.memory_space<vmem>>, %arg4: memref<8x128xf32, #tpu.memory_space<vmem>>) attributes {dimension_semantics = [#tpu.dimension_semantics<parallel>, #tpu.dimension_semantics<arbitrary>], iteration_bounds = array<i64: 1, 1>, scalar_prefetch = 0 : i64, scratch_operands = 0 : i64, tpu.core_type = #tpu.core_type<tc>, window_params = [{transform_indices = @transform_0, window_bounds = array<i64: 16, 128>}, {transform_indices = @transform_1, window_bounds = array<i64: 16, 128>}, {transform_indices = @transform_2, window_bounds = array<i64: 8, 128>}]} {
    %c0_i32 = arith.constant 0 : i32
    %0 = arith.cmpi eq, %arg1, %c0_i32 : i32
    %1 = arith.extui %0 : i1 to i32
    %c0_i32_0 = arith.constant 0 : i32
    %2 = arith.cmpi ne, %1, %c0_i32_0 : i32
    scf.if %2 {
      %cst_10 = arith.constant 0.000000e+00 : f32
      %19 = vector.broadcast %cst_10 : f32 to vector<8x128xf32>
      %c0_11 = arith.constant 0 : index
      %c0_12 = arith.constant 0 : index
      %20 = vector.load %arg4[%c0_11, %c0_12] : memref<8x128xf32, #tpu.memory_space<vmem>>, vector<8x128xf32>
      tpu.vector_store %arg4[%c0_11, %c0_12], %19 {strides = array<i32>} : memref<8x128xf32, #tpu.memory_space<vmem>>, vector<8x128xf32>,
    } else {
    }
    %c0 = arith.constant 0 : index
    %c0_1 = arith.constant 0 : index
    %3 = vector.load %arg2[%c0, %c0_1] : memref<16x128xf32, #tpu.memory_space<vmem>>, vector<16x128xf32>
    %c0_2 = arith.constant 0 : index
    %c0_3 = arith.constant 0 : index
    %4 = vector.load %arg3[%c0_2, %c0_3] : memref<16x128xf32, #tpu.memory_space<vmem>>, vector<16x128xf32>
    %5 = arith.negf %3 : vector<16x128xf32>
    %6 = math.exp %5 : vector<16x128xf32>
    %cst = arith.constant 1.000000e+00 : f32
    %7 = vector.broadcast %cst : f32 to vector<16x128xf32>
    %8 = arith.addf %7, %6 : vector<16x128xf32>
    %9 = arith.divf %7, %8 : vector<16x128xf32>
    %cst_4 = arith.constant 9.99999993E-9 : f32
    %10 = vector.broadcast %cst_4 : f32 to vector<16x128xf32>
    %11 = arith.addf %9, %10 : vector<16x128xf32>
    %12 = math.log %11 : vector<16x128xf32>
    %13 = arith.mulf %4, %12 : vector<16x128xf32>
    %c0_5 = arith.constant 0 : index
    %c0_6 = arith.constant 0 : index
    %14 = vector.load %arg4[%c0_5, %c0_6] : memref<8x128xf32, #tpu.memory_space<vmem>>, vector<8x128xf32>
    %15 = vector.shape_cast %13 : vector<16x128xf32> to vector<2x8x128xf32>
    %cst_7 = arith.constant dense<0.000000e+00> : vector<8x128xf32>
    %16 = vector.multi_reduction <add>, %15, %cst_7 [0] : vector<2x8x128xf32> to vector<8x128xf32>
    %17 = arith.addf %14, %16 : vector<8x128xf32>
    %c0_8 = arith.constant 0 : index
    %c0_9 = arith.constant 0 : index
    %18 = vector.load %arg4[%c0_8, %c0_9] : memref<8x128xf32, #tpu.memory_space<vmem>>, vector<8x128xf32>
    tpu.vector_store %arg4[%c0_8, %c0_9], %17 {strides = array<i32>} : memref<8x128xf32, #tpu.memory_space<vmem>>, vector<8x128xf32>,
    return
  }
  func.func @transform_0(%arg0: i32, %arg1: i32) -> (i32, i32) {
    %c1_i32 = arith.constant 1 : i32
    %0 = arith.muli %arg0, %c1_i32 : i32
    %1 = arith.addi %0, %arg1 : i32
    %c0_i32 = arith.constant 0 : i32
    %2 = arith.minsi %1, %c0_i32 : i32
    %c0_i32_0 = arith.constant 0 : i32
    %c0_i32_1 = arith.constant 0 : i32
    return %2, %c0_i32_0 : i32, i32
  }
  func.func @transform_1(%arg0: i32, %arg1: i32) -> (i32, i32) {
    %c1_i32 = arith.constant 1 : i32
    %0 = arith.muli %arg0, %c1_i32 : i32
    %1 = arith.addi %0, %arg1 : i32
    %c0_i32 = arith.constant 0 : i32
    %2 = arith.minsi %1, %c0_i32 : i32
    %c0_i32_0 = arith.constant 0 : i32
    %c0_i32_1 = arith.constant 0 : i32
    return %2, %c0_i32_0 : i32, i32
  }
  func.func @transform_2(%arg0: i32, %arg1: i32) -> (i32, i32) {
    %c0_i32 = arith.constant 0 : i32
    %c0_i32_0 = arith.constant 0 : i32
    return %arg0, %c0_i32 : i32, i32
  }
}

</mosaic_0001>

<llo_original>
// kernel: tpu_custom_call.1
$region0: #{tpu_custom_call.1}
  #allocation0 [shape = 'u32[]', space=smem, size = 0x4, offset = 0x4, fixed_abs, tag = 'smem constant byte address 0x4 - core index']
  #allocation1 [shape = 'u32[144,128]{1,0:T(1,128)}', space=vmem, size = 0x12000, scoped, tag = 'internal scratch']
  %s0 = inlined_call_operand.hbm [shape: f32[16,128], index: 0, kind: input, shape index: {}]
  %s1 = inlined_call_operand.hbm [shape: f32[16,128], index: 1, kind: input, shape index: {}]
  %s2 = inlined_call_operand.hbm [shape: f32[8,128], index: 2, kind: output, shape index: {}]
  %s3 = sld [smem:[#allocation0]]
  $region30: #{tpu_custom_call.1} parent=0
    _
  %s5 = ssub.s32 1, %s3
  %s6 = scalar_select 0, %s5, %s3
  $region1: #{tpu_custom_call.1} parent=0
    #allocation2 [shape = 'u8[8192]{0}', space=vmem, size = 0x2000, scoped, tag = 'input window, operand 0, single buffered']
    #allocation3 [shape = 's32[1]{0}', space=sflag, size = 0x4, scoped, tag = 'scoped memory for tpu_custom_call.1']
    #allocation4 [shape = 's32[1]{0}', space=sflag, size = 0x4, scoped, tag = 'scoped memory for tpu_custom_call.1']
    #allocation5 [shape = 'u8[8192]{0}', space=vmem, size = 0x2000, scoped, tag = 'input window, operand 1, single buffered']
    #allocation6 [shape = 's32[1]{0}', space=sflag, size = 0x4, scoped, tag = 'scoped memory for tpu_custom_call.1']
    #allocation7 [shape = 'u8[4096]{0}', space=vmem, size = 0x1000, scoped, tag = 'output window, operand 0, single buffered']
    %7 = vsyncpa [#allocation3], 0
    %8 = vsyncpa [#allocation6], 0
    %9 = vsyncpa [#allocation4], 0
    // Predicated region
    $region2: #{tpu_custom_call.1} parent=1 // pred_check
      _
    $region3: #{tpu_custom_call.1} parent=1 // pred_check_branch
      %11 = sbr.rel (0) target = $region5
    $region4: #{tpu_custom_call.1} parent=1 // pred_region
      %s12 = sadd.s32 0, 0
      %p13 = scmp.lt.s32.totalorder %s12, 0
      %s14 = scalar_select %p13, %s12, 0
      %s15 = smul.u32 2, %s14
      %s17 = ssub.s32 256, 256
      %18 = vsyncadd [#allocation3], %s17
      %s19 = smul.addr %s15, 128
      %s20 = scalar_lea.hbm %s0, %s19
      %s21 = sshll.u32 [#allocation2], 4
      %s22 = int_to_ptr.vmem [resolvable:$true] %s21
      %27 = dma.hbm_to_vmem [thread:$0]  %s20, 256, %s22, [#allocation3], 128, 128, 8
    $region5: #{tpu_custom_call.1} parent=1 // pred_fallthru
      _
    // Predicated region
    $region6: #{tpu_custom_call.1} parent=1 // pred_check
      _
    $region7: #{tpu_custom_call.1} parent=1 // pred_check_branch
      %29 = sbr.rel (0) target = $region9
    $region8: #{tpu_custom_call.1} parent=1 // pred_region
      %s30 = sadd.s32 0, 0
      %p31 = scmp.lt.s32.totalorder %s30, 0
      %s32 = scalar_select %p31, %s30, 0
      %s33 = smul.u32 2, %s32
      %s35 = ssub.s32 256, 256
      %36 = vsyncadd [#allocation6], %s35
      %s37 = smul.addr %s33, 128
      %s38 = scalar_lea.hbm %s1, %s37
      %s39 = sshll.u32 [#allocation5], 4
      %s40 = int_to_ptr.vmem [resolvable:$true] %s39
      %45 = dma.hbm_to_vmem [thread:$0]  %s38, 256, %s40, [#allocation6], 128, 128, 8
    $region9: #{tpu_custom_call.1} parent=1 // pred_fallthru
      _
    // Predicated region
    $region10: #{tpu_custom_call.1} parent=1 // pred_check
      _
    $region11: #{tpu_custom_call.1} parent=1 // pred_check_branch
      %47 = sbr.rel (0) target = $region13
    $region12: #{tpu_custom_call.1} parent=1 // pred_region
      %48 = dma.done [#allocation3], 256
    $region13: #{tpu_custom_call.1} parent=1 // pred_fallthru
      _
    // Predicated region
    $region14: #{tpu_custom_call.1} parent=1 // pred_check
      _
    $region15: #{tpu_custom_call.1} parent=1 // pred_check_branch
      %50 = sbr.rel (0) target = $region17
    $region16: #{tpu_custom_call.1} parent=1 // pred_region
      %51 = dma.done [#allocation6], 256
    $region17: #{tpu_custom_call.1} parent=1 // pred_fallthru
      _
    %s52 = sadd.s32 0, 0
    %p53 = scmp.lt.s32.totalorder %s52, 0
    %s54 = scalar_select %p53, %s52, 0
    %s55 = smul.u32 2, %s54
    %s56 = sadd.s32 0, 0
    %p57 = scmp.lt.s32.totalorder %s56, 0
    %s58 = scalar_select %p57, %s56, 0
    %s59 = smul.u32 2, %s58
    %p60 = scmp.eq.s32.totalorder 0, 0
    // Predicated region
    $region18: #{tpu_custom_call.1} parent=1 // pred_check
      %p61 = pneg %p60
    $region19: #{tpu_custom_call.1} parent=1 // pred_check_branch
      %63 = sbr.rel (%p61) target = $region21
    $region20: #{tpu_custom_call.1} parent=1 // pred_region
      %64 = vst [vmem:[#allocation7] sm:$0xff] 0.0
    $region21: #{tpu_custom_call.1} parent=1 // pred_fallthru
      _
    %v65 = vld [vmem:[#allocation2] sm:$0xff]
    %v66 = vld [vmem:[#allocation2 + $0x8] sm:$0xff]
    %v67 = vld [vmem:[#allocation5] sm:$0xff]
    %v68 = vld [vmem:[#allocation5 + $0x8] sm:$0xff]
    %v69 = vxor.u32 %v65, 2147483648
    %v70 = vxor.u32 %v66, 2147483648
    %v71 = vmul.f32 %v69, 1.442695
    %v72 = vpow.pop %v71
    %v73 = vmul.f32 %v70, 1.442695
    %v74 = vpow.pop %v73
    %v75 = vadd.f32 %v72, 1.0
    %v76 = vadd.f32 %v74, 1.0
    %v77 = vrcp.pop %v75
    %v78 = vmul.f32 1.0, %v77
    %v79 = vrcp.pop %v76
    %v80 = vmul.f32 1.0, %v79
    %v81 = vadd.f32 %v78, 1e-08
    %v82 = vadd.f32 %v80, 1e-08
    %v83 = vlog2.pop %v81
    %v84 = vmul.f32 %v83, 0.6931472
    %v85 = vlog2.pop %v82
    %v86 = vmul.f32 %v85, 0.6931472
    %v87 = vmul.f32 %v67, %v84
    %v88 = vmul.f32 %v68, %v86
    %v89 = vld [vmem:[#allocation7] sm:$0xff]
    %v90 = vadd.f32 %v87, %v88
    %v91 = vadd.f32 %v89, %v90
    %92 = vst [vmem:[#allocation7] sm:$0xff] %v91
    // Predicated region
    $region22: #{tpu_custom_call.1} parent=1 // pred_check
      _
    $region23: #{tpu_custom_call.1} parent=1 // pred_check_branch
      %94 = sbr.rel (0) target = $region25
    $region24: #{tpu_custom_call.1} parent=1 // pred_region
      %s96 = ssub.s32 128, 128
      %97 = vsyncadd [#allocation4], %s96
      %s99 = sshll.u32 [#allocation7], 4
      %s100 = int_to_ptr.vmem [resolvable:$true] %s99
      %102 = dma.vmem_to_hbm [thread:$0]  %s100, 128, %s2, [#allocation4]
    $region25: #{tpu_custom_call.1} parent=1 // pred_fallthru
      _
    // Predicated region
    $region26: #{tpu_custom_call.1} parent=1 // pred_check
      _
    $region27: #{tpu_custom_call.1} parent=1 // pred_check_branch
      %104 = sbr.rel (0) target = $region29
    $region28: #{tpu_custom_call.1} parent=1 // pred_region
      %105 = dma.done [#allocation4], 128
    $region29: #{tpu_custom_call.1} parent=1 // pred_fallthru
      _
    %106 = vsyncpa [#allocation3], 1
    %107 = vsyncpa [#allocation6], 1
    %108 = vsyncpa [#allocation4], 1

</llo_original>
